<compile_context>
chip_gen: v7x
topology: tpu7x:2x2x1
jax: 0.10.0
libtpu: 0.0.40
codegen_flags: <defaults>
</compile_context>

<pallas_src>
import jax
import jax.numpy as jnp
from jax.experimental import pallas as pl
from jax.experimental.pallas import tpu as pltpu

EPS = 1e-5          # nn.BatchNorm1d default eps
H1, H2 = 512, 256   # hidden widths from the PyTorch module
NC_PAD = 128        # lane-dense padded class dimension
NEG_BIG = -1e30     # logit mask for padded class lanes (exp -> 0)


def _bn_relu_train(h, gamma, beta):
    """Training-mode BatchNorm1d (biased variance) fused into one scale/shift pass, then ReLU."""
    inv_n = 1.0 / h.shape[0]
    s = jnp.sum(h, axis=0, keepdims=True)
    ss = jnp.sum(h * h, axis=0, keepdims=True)
    mean = s * inv_n
    var = ss * inv_n - mean * mean
    scale = gamma * jax.lax.rsqrt(var + EPS)
    shift = beta - mean * scale
    return jnp.maximum(h * scale + shift, 0.0)


def mlp3_kernel(x_ref, w1_ref, w2_ref, w3_ref, b3_ref, bn_ref, out_ref):
    # x: (B, D_in) bf16; w1/w2/w3: bf16; b3 / packed BN params: f32.
    x = x_ref[...]

    # fc1 -> BN1 -> ReLU.  fc1's bias is mathematically cancelled by BN's batch-mean
    # subtraction, so it is neither DMA'd nor added.
    h1 = jnp.dot(x, w1_ref[...], preferred_element_type=jnp.float32)
    h1 = _bn_relu_train(h1, bn_ref[:, 0:H1], bn_ref[:, H1:2 * H1])

    # fc2 -> BN2 -> ReLU (bias likewise dropped).
    h2 = jnp.dot(h1.astype(jnp.bfloat16), w2_ref[...],
                 preferred_element_type=jnp.float32)
    h2 = _bn_relu_train(h2,
                        bn_ref[:, 2 * H1:2 * H1 + H2],
                        bn_ref[:, 2 * H1 + H2:2 * H1 + 2 * H2])

    # fc3 -> softmax over a lane-dense 128-wide padded class dim.  Padded lanes have
    # zero weight columns and NEG_BIG bias, so they contribute exp(...) == 0.
    logits = jnp.dot(h2.astype(jnp.bfloat16), w3_ref[...],
                     preferred_element_type=jnp.float32) + b3_ref[...]
    logits = logits - jnp.max(logits, axis=-1, keepdims=True)
    e = jnp.exp(logits)
    denom = jnp.sum(e, axis=-1, keepdims=True)
    out_ref[...] = e * pl.reciprocal(denom, approx=False)


def mlp3_forward(x, params):
    """x: (B, H, W) float32 with image_C == 1. Returns (B, num_classes) softmax probs."""
    B = x.shape[0]
    x2d = x.reshape(B, -1).astype(jnp.bfloat16)      # flatten (the PyTorch .view) + bf16 for MXU
    d_in = x2d.shape[1]

    bn_pack = jnp.concatenate(
        [params["g1"], params["be1"], params["g2"], params["be2"]], axis=1)  # (1, 1536)

    w3p, b3p = params["w3p"], params["b3p"]
    nc_pad = w3p.shape[1]

    args = (x2d, params["w1"], params["w2"], w3p, b3p, bn_pack)

    flops = 2 * B * (d_in * H1 + H1 * H2 + H2 * nc_pad)
    bytes_accessed = int(sum(int(a.size) * a.dtype.itemsize for a in args) + B * nc_pad * 4)
    cost = pl.CostEstimate(flops=flops, transcendentals=B * nc_pad,
                           bytes_accessed=bytes_accessed)

    vmem = pl.BlockSpec(memory_space=pltpu.MemorySpace.VMEM)
    probs_padded = pl.pallas_call(
        mlp3_kernel,
        out_shape=jax.ShapeDtypeStruct((B, nc_pad), jnp.float32),
        in_specs=[vmem] * len(args),
        out_specs=vmem,
        cost_estimate=cost,
    )(*args)
    # TODO(synk): for large batches, add a batch grid with VMEM-resident weights and a
    # two-pass cross-tile reduction for the BN batch statistics (full-batch mean/var),
    # with tiles re-sized for v7x's 64 MiB VMEM.
    return probs_padded[:, :params["num_classes"]]


def init_params(key, d_in, num_classes, nc_pad=NC_PAD):
    ks = jax.random.split(key, 4)

    def linear_w(kw, fan_in, fan_out):
        # PyTorch nn.Linear default init: U(-1/sqrt(fan_in), 1/sqrt(fan_in))
        bound = 1.0 / jnp.sqrt(fan_in)
        return jax.random.uniform(kw, (fan_in, fan_out), jnp.float32, -bound, bound)

    w1 = linear_w(ks[0], d_in, H1)
    w2 = linear_w(ks[1], H1, H2)
    w3 = linear_w(ks[2], H2, num_classes)
    bound3 = 1.0 / jnp.sqrt(H2)
    b3 = jax.random.uniform(ks[3], (1, num_classes), jnp.float32, -bound3, bound3)

    # fc1/fc2 biases are omitted on purpose: training-mode BN subtracts the batch mean
    # immediately after them, so any per-feature bias is exactly cancelled.

    # Pad fc3 to a lane-dense 128-wide class dim (zero weight columns, NEG_BIG bias).
    w3p = jnp.zeros((H2, nc_pad), jnp.float32).at[:, :num_classes].set(w3)
    b3p = jnp.full((1, nc_pad), NEG_BIG, jnp.float32).at[:, :num_classes].set(b3)

    return dict(
        w1=w1.astype(jnp.bfloat16),
        w2=w2.astype(jnp.bfloat16),
        w3p=w3p.astype(jnp.bfloat16),
        b3p=b3p,
        g1=jnp.ones((1, H1), jnp.float32), be1=jnp.zeros((1, H1), jnp.float32),
        g2=jnp.ones((1, H2), jnp.float32), be2=jnp.zeros((1, H2), jnp.float32),
        num_classes=num_classes,
    )


def _ref_bn(h, gamma, beta):
    mean = jnp.mean(h, axis=0, keepdims=True)
    var = jnp.mean((h - mean) * (h - mean), axis=0, keepdims=True)
    return gamma * (h - mean) * jax.lax.rsqrt(var + EPS) + beta


def _reference(x, p):
    # Pure-JAX reference of the same forward (same bf16 dot inputs / f32 accumulate).
    nc = p["num_classes"]
    h = jnp.dot(x.reshape(x.shape[0], -1).astype(jnp.bfloat16), p["w1"],
                preferred_element_type=jnp.float32)
    h = jnp.maximum(_ref_bn(h, p["g1"], p["be1"]), 0.0)
    h = jnp.dot(h.astype(jnp.bfloat16), p["w2"], preferred_element_type=jnp.float32)
    h = jnp.maximum(_ref_bn(h, p["g2"], p["be2"]), 0.0)
    logits = jnp.dot(h.astype(jnp.bfloat16), p["w3p"][:, :nc],
                     preferred_element_type=jnp.float32) + p["b3p"][:, :nc]
    return jax.nn.softmax(logits, axis=-1)


if __name__ == "__main__":
    # config: image_C=1, image_H=16, image_W=16, num_classes=10
    B, H, W, NC = 8, 16, 16, 10
    D_IN = 1 * H * W

    key = jax.random.PRNGKey(0)
    kx, kp = jax.random.split(key)
    x = jax.random.normal(kx, (B, H, W), jnp.float32)
    params = init_params(kp, D_IN, NC)

    out = jax.block_until_ready(mlp3_forward(x, params))
    ref = _reference(x, params)

    assert out.shape == (B, NC)
    # padded class lanes contribute exactly 0 probability, so the visible classes sum to 1
    assert jnp.allclose(jnp.sum(out, axis=-1), 1.0, atol=1e-4)
    assert jnp.allclose(out, ref, atol=5e-4, rtol=5e-3)

    print("KERNEL_OK")
</pallas_src>

<mosaic_0001>
module attributes {stable_mosaic.version = 11 : i64} {
  func.func @mlp3_kernel(%arg0: memref<8x256xbf16, #tpu.memory_space<vmem>>, %arg1: memref<256x512xbf16, #tpu.memory_space<vmem>>, %arg2: memref<512x256xbf16, #tpu.memory_space<vmem>>, %arg3: memref<256x128xbf16, #tpu.memory_space<vmem>>, %arg4: memref<1x128xf32, #tpu.memory_space<vmem>>, %arg5: memref<1x1536xf32, #tpu.memory_space<vmem>>, %arg6: memref<8x128xf32, #tpu.memory_space<vmem>>) attributes {dimension_semantics = [], scalar_prefetch = 0 : i64, scratch_operands = 0 : i64, tpu.core_type = #tpu.core_type<tc>} {
    %c0 = arith.constant 0 : index
    %c0_0 = arith.constant 0 : index
    %0 = vector.load %arg0[%c0, %c0_0] : memref<8x256xbf16, #tpu.memory_space<vmem>>, vector<8x256xbf16>
    %c0_1 = arith.constant 0 : index
    %c0_2 = arith.constant 0 : index
    %1 = vector.load %arg1[%c0_1, %c0_2] : memref<256x512xbf16, #tpu.memory_space<vmem>>, vector<256x512xbf16>
    %cst = arith.constant dense<0.000000e+00> : vector<8x512xf32>
    %2 = tpu.matmul %0, %1, %cst {dimension_numbers = #tpu.dot_dimension_numbers<[1], [0], [0], [1], [0, 0, 1, 1], [], []>} : vector<8x256xbf16>, vector<256x512xbf16>, vector<8x512xf32> -> vector<8x512xf32>
    %c0_3 = arith.constant 0 : index
    %c0_4 = arith.constant 0 : index
    %3 = vector.load %arg5[%c0_3, %c0_4] : memref<1x1536xf32, #tpu.memory_space<vmem>>, vector<1x512xf32>
    %c0_5 = arith.constant 0 : index
    %c512 = arith.constant 512 : index
    %4 = vector.load %arg5[%c0_5, %c512] : memref<1x1536xf32, #tpu.memory_space<vmem>>, vector<1x512xf32>
    %cst_6 = arith.constant dense<0.000000e+00> : vector<512xf32>
    %5 = vector.multi_reduction <add>, %2, %cst_6 [0] : vector<8x512xf32> to vector<512xf32>
    %6 = vector.shape_cast %5 : vector<512xf32> to vector<1x512xf32>
    %7 = arith.mulf %2, %2 : vector<8x512xf32>
    %cst_7 = arith.constant dense<0.000000e+00> : vector<512xf32>
    %8 = vector.multi_reduction <add>, %7, %cst_7 [0] : vector<8x512xf32> to vector<512xf32>
    %9 = vector.shape_cast %8 : vector<512xf32> to vector<1x512xf32>
    %cst_8 = arith.constant 1.250000e-01 : f32
    %10 = vector.broadcast %cst_8 : f32 to vector<1x512xf32>
    %11 = arith.mulf %6, %10 : vector<1x512xf32>
    %cst_9 = arith.constant 1.250000e-01 : f32
    %12 = vector.broadcast %cst_9 : f32 to vector<1x512xf32>
    %13 = arith.mulf %9, %12 : vector<1x512xf32>
    %14 = arith.mulf %11, %11 : vector<1x512xf32>
    %15 = arith.subf %13, %14 : vector<1x512xf32>
    %cst_10 = arith.constant 9.99999974E-6 : f32
    %16 = vector.broadcast %cst_10 : f32 to vector<1x512xf32>
    %17 = arith.addf %15, %16 : vector<1x512xf32>
    %18 = math.rsqrt %17 : vector<1x512xf32>
    %19 = arith.mulf %3, %18 : vector<1x512xf32>
    %20 = arith.mulf %11, %19 : vector<1x512xf32>
    %21 = arith.subf %4, %20 : vector<1x512xf32>
    %22 = vector.broadcast %19 : vector<1x512xf32> to vector<8x512xf32>
    %23 = arith.mulf %2, %22 : vector<8x512xf32>
    %24 = vector.broadcast %21 : vector<1x512xf32> to vector<8x512xf32>
    %25 = arith.addf %23, %24 : vector<8x512xf32>
    %cst_11 = arith.constant 0.000000e+00 : f32
    %26 = vector.broadcast %cst_11 : f32 to vector<8x512xf32>
    %27 = arith.maximumf %25, %26 : vector<8x512xf32>
    %28 = arith.truncf %27 : vector<8x512xf32> to vector<8x512xbf16>
    %c0_12 = arith.constant 0 : index
    %c0_13 = arith.constant 0 : index
    %29 = vector.load %arg2[%c0_12, %c0_13] : memref<512x256xbf16, #tpu.memory_space<vmem>>, vector<512x256xbf16>
    %cst_14 = arith.constant dense<0.000000e+00> : vector<8x256xf32>
    %30 = tpu.matmul %28, %29, %cst_14 {dimension_numbers = #tpu.dot_dimension_numbers<[1], [0], [0], [1], [0, 0, 1, 1], [], []>} : vector<8x512xbf16>, vector<512x256xbf16>, vector<8x256xf32> -> vector<8x256xf32>
    %c0_15 = arith.constant 0 : index
    %c1024 = arith.constant 1024 : index
    %31 = vector.load %arg5[%c0_15, %c1024] : memref<1x1536xf32, #tpu.memory_space<vmem>>, vector<1x256xf32>
    %c0_16 = arith.constant 0 : index
    %c1280 = arith.constant 1280 : index
    %32 = vector.load %arg5[%c0_16, %c1280] : memref<1x1536xf32, #tpu.memory_space<vmem>>, vector<1x256xf32>
    %cst_17 = arith.constant dense<0.000000e+00> : vector<256xf32>
    %33 = vector.multi_reduction <add>, %30, %cst_17 [0] : vector<8x256xf32> to vector<256xf32>
    %34 = vector.shape_cast %33 : vector<256xf32> to vector<1x256xf32>
    %35 = arith.mulf %30, %30 : vector<8x256xf32>
    %cst_18 = arith.constant dense<0.000000e+00> : vector<256xf32>
    %36 = vector.multi_reduction <add>, %35, %cst_18 [0] : vector<8x256xf32> to vector<256xf32>
    %37 = vector.shape_cast %36 : vector<256xf32> to vector<1x256xf32>
    %cst_19 = arith.constant 1.250000e-01 : f32
    %38 = vector.broadcast %cst_19 : f32 to vector<1x256xf32>
    %39 = arith.mulf %34, %38 : vector<1x256xf32>
    %cst_20 = arith.constant 1.250000e-01 : f32
    %40 = vector.broadcast %cst_20 : f32 to vector<1x256xf32>
    %41 = arith.mulf %37, %40 : vector<1x256xf32>
    %42 = arith.mulf %39, %39 : vector<1x256xf32>
    %43 = arith.subf %41, %42 : vector<1x256xf32>
    %cst_21 = arith.constant 9.99999974E-6 : f32
    %44 = vector.broadcast %cst_21 : f32 to vector<1x256xf32>
    %45 = arith.addf %43, %44 : vector<1x256xf32>
    %46 = math.rsqrt %45 : vector<1x256xf32>
    %47 = arith.mulf %31, %46 : vector<1x256xf32>
    %48 = arith.mulf %39, %47 : vector<1x256xf32>
    %49 = arith.subf %32, %48 : vector<1x256xf32>
    %50 = vector.broadcast %47 : vector<1x256xf32> to vector<8x256xf32>
    %51 = arith.mulf %30, %50 : vector<8x256xf32>
    %52 = vector.broadcast %49 : vector<1x256xf32> to vector<8x256xf32>
    %53 = arith.addf %51, %52 : vector<8x256xf32>
    %cst_22 = arith.constant 0.000000e+00 : f32
    %54 = vector.broadcast %cst_22 : f32 to vector<8x256xf32>
    %55 = arith.maximumf %53, %54 : vector<8x256xf32>
    %56 = arith.truncf %55 : vector<8x256xf32> to vector<8x256xbf16>
    %c0_23 = arith.constant 0 : index
    %c0_24 = arith.constant 0 : index
    %57 = vector.load %arg3[%c0_23, %c0_24] : memref<256x128xbf16, #tpu.memory_space<vmem>>, vector<256x128xbf16>
    %cst_25 = arith.constant dense<0.000000e+00> : vector<8x128xf32>
    %58 = tpu.matmul %56, %57, %cst_25 {dimension_numbers = #tpu.dot_dimension_numbers<[1], [0], [0], [1], [0, 0, 1, 1], [], []>} : vector<8x256xbf16>, vector<256x128xbf16>, vector<8x128xf32> -> vector<8x128xf32>
    %c0_26 = arith.constant 0 : index
    %c0_27 = arith.constant 0 : index
    %59 = vector.load %arg4[%c0_26, %c0_27] : memref<1x128xf32, #tpu.memory_space<vmem>>, vector<1x128xf32>
    %60 = vector.broadcast %59 : vector<1x128xf32> to vector<8x128xf32>
    %61 = arith.addf %58, %60 : vector<8x128xf32>
    %cst_28 = arith.constant dense<0xFF800000> : vector<8xf32>
    %62 = vector.multi_reduction <maximumf>, %61, %cst_28 [1] : vector<8x128xf32> to vector<8xf32>
    %63 = vector.shape_cast %62 : vector<8xf32> to vector<8x1xf32>
    %64 = vector.broadcast %63 : vector<8x1xf32> to vector<8x128xf32>
    %65 = arith.subf %61, %64 : vector<8x128xf32>
    %66 = math.exp %65 : vector<8x128xf32>
    %cst_29 = arith.constant dense<0.000000e+00> : vector<8xf32>
    %67 = vector.multi_reduction <add>, %66, %cst_29 [1] : vector<8x128xf32> to vector<8xf32>
    %68 = vector.shape_cast %67 : vector<8xf32> to vector<8x1xf32>
    %69 = tpu.reciprocal %68 : vector<8x1xf32> -> vector<8x1xf32>
    %70 = vector.broadcast %69 : vector<8x1xf32> to vector<8x128xf32>
    %71 = arith.mulf %66, %70 : vector<8x128xf32>
    %c0_30 = arith.constant 0 : index
    %c0_31 = arith.constant 0 : index
    %72 = vector.load %arg6[%c0_30, %c0_31] : memref<8x128xf32, #tpu.memory_space<vmem>>, vector<8x128xf32>
    tpu.vector_store %arg6[%c0_30, %c0_31], %71 {strides = array<i32>} : memref<8x128xf32, #tpu.memory_space<vmem>>, vector<8x128xf32>,
    return
  }
}

</mosaic_0001>

<llo_original>
// kernel: tpu_custom_call.1
$region0: #{tpu_custom_call.1}
  #allocation0 [shape = 'u32[]', space=smem, size = 0x4, offset = 0x4, fixed_abs, tag = 'smem constant byte address 0x4 - core index']
  #allocation1 [shape = 'u32[144,128]{1,0:T(1,128)}', space=vmem, size = 0x12000, scoped, tag = 'internal scratch']
  %s0 = inlined_call_operand.hbm [shape: bf16[8,256], index: 0, kind: input, shape index: {}]
  %s1 = inlined_call_operand.hbm [shape: bf16[256,512], index: 1, kind: input, shape index: {}]
  %s2 = inlined_call_operand.hbm [shape: bf16[512,256], index: 2, kind: input, shape index: {}]
  %s3 = inlined_call_operand.hbm [shape: bf16[256,128], index: 3, kind: input, shape index: {}]
  %s4 = inlined_call_operand.vmem [shape: f32[1,128], index: 4, kind: input, shape index: {}]
  %s5 = inlined_call_operand.vmem [shape: f32[1,1536], index: 5, kind: input, shape index: {}]
  %s6 = inlined_call_operand.hbm [shape: f32[8,128], index: 6, kind: output, shape index: {}]
  %s7 = sld [smem:[#allocation0]]
  $region50: #{tpu_custom_call.1} parent=0
    _
  %s9 = ssub.s32 1, %s7
  %s10 = scalar_select 0, %s9, %s7
  $region1: #{tpu_custom_call.1} parent=0
    #allocation2 [shape = 'u8[4096]{0}', space=vmem, size = 0x1000, scoped, tag = 'input window, operand 0, single buffered']
    #allocation3 [shape = 's32[1]{0}', space=sflag, size = 0x4, scoped, tag = 'scoped memory for tpu_custom_call.1']
    #allocation4 [shape = 's32[1]{0}', space=sflag, size = 0x4, scoped, tag = 'scoped memory for tpu_custom_call.1']
    #allocation5 [shape = 'u8[262144]{0}', space=vmem, size = 0x40000, scoped, tag = 'input window, operand 1, single buffered']
    #allocation6 [shape = 's32[1]{0}', space=sflag, size = 0x4, scoped, tag = 'scoped memory for tpu_custom_call.1']
    #allocation7 [shape = 'u8[262144]{0}', space=vmem, size = 0x40000, scoped, tag = 'input window, operand 2, single buffered']
    #allocation8 [shape = 'u8[65536]{0}', space=vmem, size = 0x10000, scoped, tag = 'input window, operand 3, single buffered']
    #allocation9 [shape = 's32[1]{0}', space=sflag, size = 0x4, scoped, tag = 'scoped memory for tpu_custom_call.1']
    #allocation10 [shape = 'u8[4096]{0}', space=vmem, size = 0x1000, scoped, tag = 'output window, operand 0, single buffered']
    %11 = vsyncpa [#allocation3], 0
    %12 = vsyncpa [#allocation6], 0
    %13 = vsyncpa [#allocation9], 0
    %14 = vsyncpa [#allocation4], 0
    // Predicated region
    $region2: #{tpu_custom_call.1} parent=1 // pred_check
      _
    $region3: #{tpu_custom_call.1} parent=1 // pred_check_branch
      %16 = sbr.rel (0) target = $region5
    $region4: #{tpu_custom_call.1} parent=1 // pred_region
      %s18 = ssub.s32 128, 128
      %19 = vsyncadd [#allocation3], %s18
      %s21 = sshll.u32 [#allocation2], 4
      %s22 = int_to_ptr.vmem [resolvable:$true] %s21
      %24 = dma.hbm_to_vmem [thread:$0]  %s0, 128, %s22, [#allocation3]
    $region5: #{tpu_custom_call.1} parent=1 // pred_fallthru
      _
    // Predicated region
    $region6: #{tpu_custom_call.1} parent=1 // pred_check
      _
    $region7: #{tpu_custom_call.1} parent=1 // pred_check_branch
      %26 = sbr.rel (0) target = $region9
    $region8: #{tpu_custom_call.1} parent=1 // pred_region
      %s28 = ssub.s32 8192, 8192
      %29 = vsyncadd [#allocation6], %s28
      %s30 = sshll.u32 [#allocation5], 4
      %s31 = int_to_ptr.vmem [resolvable:$true] %s30
      %36 = dma.hbm_to_vmem [thread:$0]  %s1, 8192, %s31, [#allocation6], 256, 256, 16
    $region9: #{tpu_custom_call.1} parent=1 // pred_fallthru
      _
    // Predicated region
    $region10: #{tpu_custom_call.1} parent=1 // pred_check
      _
    $region11: #{tpu_custom_call.1} parent=1 // pred_check_branch
      %38 = sbr.rel (0) target = $region13
    $region12: #{tpu_custom_call.1} parent=1 // pred_region
      %s40 = ssub.s32 8192, 8192
      %41 = vsyncadd [#allocation6], %s40
      %s42 = sshll.u32 [#allocation7], 4
      %s43 = int_to_ptr.vmem [resolvable:$true] %s42
      %48 = dma.hbm_to_vmem [thread:$0]  %s2, 8192, %s43, [#allocation6], 128, 128, 8
    $region13: #{tpu_custom_call.1} parent=1 // pred_fallthru
      _
    // Predicated region
    $region14: #{tpu_custom_call.1} parent=1 // pred_check
      _
    $region15: #{tpu_custom_call.1} parent=1 // pred_check_branch
      %50 = sbr.rel (0) target = $region17
    $region16: #{tpu_custom_call.1} parent=1 // pred_region
      %s52 = ssub.s32 2048, 2048
      %53 = vsyncadd [#allocation9], %s52
      %s54 = sshll.u32 [#allocation8], 4
      %s55 = int_to_ptr.vmem [resolvable:$true] %s54
      %60 = dma.hbm_to_vmem [thread:$0]  %s3, 2048, %s55, [#allocation9], 64, 64, 4
    $region17: #{tpu_custom_call.1} parent=1 // pred_fallthru
      _
    // Predicated region
    $region18: #{tpu_custom_call.1} parent=1 // pred_check
      _
    $region19: #{tpu_custom_call.1} parent=1 // pred_check_branch
      %62 = sbr.rel (0) target = $region21
    $region20: #{tpu_custom_call.1} parent=1 // pred_region
      _
    $region21: #{tpu_custom_call.1} parent=1 // pred_fallthru
      _
    // Predicated region
    $region22: #{tpu_custom_call.1} parent=1 // pred_check
      _
    $region23: #{tpu_custom_call.1} parent=1 // pred_check_branch
      %64 = sbr.rel (0) target = $region25
    $region24: #{tpu_custom_call.1} parent=1 // pred_region
      _
    $region25: #{tpu_custom_call.1} parent=1 // pred_fallthru
      _
    // Predicated region
    $region26: #{tpu_custom_call.1} parent=1 // pred_check
      _
    $region27: #{tpu_custom_call.1} parent=1 // pred_check_branch
      %66 = sbr.rel (0) target = $region29
    $region28: #{tpu_custom_call.1} parent=1 // pred_region
      %67 = dma.done [#allocation3], 128
    $region29: #{tpu_custom_call.1} parent=1 // pred_fallthru
      _
    // Predicated region
    $region30: #{tpu_custom_call.1} parent=1 // pred_check
      _
    $region31: #{tpu_custom_call.1} parent=1 // pred_check_branch
      %69 = sbr.rel (0) target = $region33
    $region32: #{tpu_custom_call.1} parent=1 // pred_region
      %70 = dma.done [#allocation6], 8192
    $region33: #{tpu_custom_call.1} parent=1 // pred_fallthru
      _
    // Predicated region
    $region34: #{tpu_custom_call.1} parent=1 // pred_check
      _
    $region35: #{tpu_custom_call.1} parent=1 // pred_check_branch
      %72 = sbr.rel (0) target = $region37
    $region36: #{tpu_custom_call.1} parent=1 // pred_region
      %73 = dma.done [#allocation6], 8192
    $region37: #{tpu_custom_call.1} parent=1 // pred_fallthru
      _
    // Predicated region
    $region38: #{tpu_custom_call.1} parent=1 // pred_check
      _
    $region39: #{tpu_custom_call.1} parent=1 // pred_check_branch
      %75 = sbr.rel (0) target = $region41
    $region40: #{tpu_custom_call.1} parent=1 // pred_region
      %76 = dma.done [#allocation9], 2048
    $region41: #{tpu_custom_call.1} parent=1 // pred_fallthru
      _
    %v78 = vld [vmem:[#allocation2] sm:$0xff]
    %v79 = vld [vmem:[#allocation5] sm:$0xff]
    %v80 = vld [vmem:[#allocation5 + $0x8] sm:$0xff]
    %v81 = vld [vmem:[#allocation5 + $0x10] sm:$0xff]
    %v82 = vld [vmem:[#allocation5 + $0x18] sm:$0xff]
    %v83 = vld [vmem:[#allocation5 + $0x20] sm:$0xff]
    %v84 = vld [vmem:[#allocation5 + $0x28] sm:$0xff]
    %v85 = vld [vmem:[#allocation5 + $0x30] sm:$0xff]
    %v86 = vld [vmem:[#allocation5 + $0x38] sm:$0xff]
    %v87 = vld [vmem:[#allocation5 + $0x40] sm:$0xff]
    %v88 = vld [vmem:[#allocation5 + $0x48] sm:$0xff]
    %v89 = vld [vmem:[#allocation5 + $0x50] sm:$0xff]
    %v90 = vld [vmem:[#allocation5 + $0x58] sm:$0xff]
    %v91 = vld [vmem:[#allocation5 + $0x60] sm:$0xff]
    %v92 = vld [vmem:[#allocation5 + $0x68] sm:$0xff]
    %v93 = vld [vmem:[#allocation5 + $0x70] sm:$0xff]
    %v94 = vld [vmem:[#allocation5 + $0x78] sm:$0xff]
    %v95 = vld [vmem:[#allocation5 + $0x80] sm:$0xff]
    %v96 = vld [vmem:[#allocation5 + $0x88] sm:$0xff]
    %v97 = vld [vmem:[#allocation5 + $0x90] sm:$0xff]
    %v98 = vld [vmem:[#allocation5 + $0x98] sm:$0xff]
    %v99 = vld [vmem:[#allocation5 + $0xa0] sm:$0xff]
    %v100 = vld [vmem:[#allocation5 + $0xa8] sm:$0xff]
    %v101 = vld [vmem:[#allocation5 + $0xb0] sm:$0xff]
    %v102 = vld [vmem:[#allocation5 + $0xb8] sm:$0xff]
    %v103 = vld [vmem:[#allocation5 + $0xc0] sm:$0xff]
    %v104 = vld [vmem:[#allocation5 + $0xc8] sm:$0xff]
    %v105 = vld [vmem:[#allocation5 + $0xd0] sm:$0xff]
    %v106 = vld [vmem:[#allocation5 + $0xd8] sm:$0xff]
    %v107 = vld [vmem:[#allocation5 + $0xe0] sm:$0xff]
    %v108 = vld [vmem:[#allocation5 + $0xe8] sm:$0xff]
    %v109 = vld [vmem:[#allocation5 + $0xf0] sm:$0xff]
    %v110 = vld [vmem:[#allocation5 + $0xf8] sm:$0xff]
    %v111 = vld [vmem:[#allocation5 + $0x100] sm:$0xff]
    %v112 = vld [vmem:[#allocation5 + $0x108] sm:$0xff]
    %v113 = vld [vmem:[#allocation5 + $0x110] sm:$0xff]
    %v114 = vld [vmem:[#allocation5 + $0x118] sm:$0xff]
    %v115 = vld [vmem:[#allocation5 + $0x120] sm:$0xff]
    %v116 = vld [vmem:[#allocation5 + $0x128] sm:$0xff]
    %v117 = vld [vmem:[#allocation5 + $0x130] sm:$0xff]
    %v118 = vld [vmem:[#allocation5 + $0x138] sm:$0xff]
    %v119 = vld [vmem:[#allocation5 + $0x140] sm:$0xff]
    %v120 = vld [vmem:[#allocation5 + $0x148] sm:$0xff]
    %v121 = vld [vmem:[#allocation5 + $0x150] sm:$0xff]
    %v122 = vld [vmem:[#allocation5 + $0x158] sm:$0xff]
    %v123 = vld [vmem:[#allocation5 + $0x160] sm:$0xff]
    %v124 = vld [vmem:[#allocation5 + $0x168] sm:$0xff]
    %v125 = vld [vmem:[#allocation5 + $0x170] sm:$0xff]
    %v126 = vld [vmem:[#allocation5 + $0x178] sm:$0xff]
    %v127 = vld [vmem:[#allocation5 + $0x180] sm:$0xff]
    %v128 = vld [vmem:[#allocation5 + $0x188] sm:$0xff]
    %v129 = vld [vmem:[#allocation5 + $0x190] sm:$0xff]
    %v130 = vld [vmem:[#allocation5 + $0x198] sm:$0xff]
    %v131 = vld [vmem:[#allocation5 + $0x1a0] sm:$0xff]
    %v132 = vld [vmem:[#allocation5 + $0x1a8] sm:$0xff]
    %v133 = vld [vmem:[#allocation5 + $0x1b0] sm:$0xff]
    %v134 = vld [vmem:[#allocation5 + $0x1b8] sm:$0xff]
    %v135 = vld [vmem:[#allocation5 + $0x1c0] sm:$0xff]
    %v136 = vld [vmem:[#allocation5 + $0x1c8] sm:$0xff]
    %v137 = vld [vmem:[#allocation5 + $0x1d0] sm:$0xff]
    %v138 = vld [vmem:[#allocation5 + $0x1d8] sm:$0xff]
    %v139 = vld [vmem:[#allocation5 + $0x1e0] sm:$0xff]
    %v140 = vld [vmem:[#allocation5 + $0x1e8] sm:$0xff]
    %v141 = vld [vmem:[#allocation5 + $0x1f0] sm:$0xff]
    %v142 = vld [vmem:[#allocation5 + $0x1f8] sm:$0xff]
    %v144 = vunpack.c.l.b16 %v78
    %v145 = vunpack.c.h.b16 %v78
    %v146 = vpack.c.b16 %v144, %v144
    %v147 = vpack.c.b16 %v145, %v145
    %v214 = vunpack.c.l.b16 %v79
    %v215 = vunpack.c.h.b16 %v79
    %v216 = vunpack.c.l.b16 %v80
    %v217 = vunpack.c.h.b16 %v80
    %v218 = vunpack.c.l.b16 %v81
    %v219 = vunpack.c.h.b16 %v81
    %v220 = vunpack.c.l.b16 %v82
    %v221 = vunpack.c.h.b16 %v82
    %v222 = vunpack.c.l.b16 %v83
    %v223 = vunpack.c.h.b16 %v83
    %v224 = vunpack.c.l.b16 %v84
    %v225 = vunpack.c.h.b16 %v84
    %v226 = vunpack.c.l.b16 %v85
    %v227 = vunpack.c.h.b16 %v85
    %v228 = vunpack.c.l.b16 %v86
    %v229 = vunpack.c.h.b16 %v86
    %v230 = vunpack.c.l.b16 %v87
    %v231 = vunpack.c.h.b16 %v87
    %v232 = vunpack.c.l.b16 %v88
    %v233 = vunpack.c.h.b16 %v88
    %v234 = vunpack.c.l.b16 %v89
    %v235 = vunpack.c.h.b16 %v89
    %v236 = vunpack.c.l.b16 %v90
    %v237 = vunpack.c.h.b16 %v90
    %v238 = vunpack.c.l.b16 %v91
    %v239 = vunpack.c.h.b16 %v91
    %v240 = vunpack.c.l.b16 %v92
    %v241 = vunpack.c.h.b16 %v92
    %v242 = vunpack.c.l.b16 %v93
    %v243 = vunpack.c.h.b16 %v93
    %v244 = vunpack.c.l.b16 %v94
    %v245 = vunpack.c.h.b16 %v94
    %v246 = vunpack.c.l.b16 %v95
    %v247 = vunpack.c.h.b16 %v95
    %v248 = vunpack.c.l.b16 %v96
    %v249 = vunpack.c.h.b16 %v96
    %v250 = vunpack.c.l.b16 %v97
    %v251 = vunpack.c.h.b16 %v97
    %v252 = vunpack.c.l.b16 %v98
    %v253 = vunpack.c.h.b16 %v98
    %v254 = vunpack.c.l.b16 %v99
    %v255 = vunpack.c.h.b16 %v99
    %v256 = vunpack.c.l.b16 %v100
    %v257 = vunpack.c.h.b16 %v100
    %v258 = vunpack.c.l.b16 %v101
    %v259 = vunpack.c.h.b16 %v101
    %v260 = vunpack.c.l.b16 %v102
    %v261 = vunpack.c.h.b16 %v102
    %v262 = vunpack.c.l.b16 %v103
    %v263 = vunpack.c.h.b16 %v103
    %v264 = vunpack.c.l.b16 %v104
    %v265 = vunpack.c.h.b16 %v104
    %v266 = vunpack.c.l.b16 %v105
    %v267 = vunpack.c.h.b16 %v105
    %v268 = vunpack.c.l.b16 %v106
    %v269 = vunpack.c.h.b16 %v106
    %v270 = vunpack.c.l.b16 %v107
    %v271 = vunpack.c.h.b16 %v107
    %v272 = vunpack.c.l.b16 %v108
    %v273 = vunpack.c.h.b16 %v108
    %v274 = vunpack.c.l.b16 %v109
    %v275 = vunpack.c.h.b16 %v109
    %v276 = vunpack.c.l.b16 %v110
    %v277 = vunpack.c.h.b16 %v110
    %v278 = vunpack.c.l.b16 %v111
    %v279 = vunpack.c.h.b16 %v111
    %v280 = vunpack.c.l.b16 %v112
    %v281 = vunpack.c.h.b16 %v112
    %v282 = vunpack.c.l.b16 %v113
    %v283 = vunpack.c.h.b16 %v113
    %v284 = vunpack.c.l.b16 %v114
    %v285 = vunpack.c.h.b16 %v114
    %v286 = vunpack.c.l.b16 %v115
    %v287 = vunpack.c.h.b16 %v115
    %v288 = vunpack.c.l.b16 %v116
    %v289 = vunpack.c.h.b16 %v116
    %v290 = vunpack.c.l.b16 %v117
    %v291 = vunpack.c.h.b16 %v117
    %v292 = vunpack.c.l.b16 %v118
    %v293 = vunpack.c.h.b16 %v118
    %v294 = vunpack.c.l.b16 %v119
    %v295 = vunpack.c.h.b16 %v119
    %v296 = vunpack.c.l.b16 %v120
    %v297 = vunpack.c.h.b16 %v120
    %v298 = vunpack.c.l.b16 %v121
    %v299 = vunpack.c.h.b16 %v121
    %v300 = vunpack.c.l.b16 %v122
    %v301 = vunpack.c.h.b16 %v122
    %v302 = vunpack.c.l.b16 %v123
    %v303 = vunpack.c.h.b16 %v123
    %v304 = vunpack.c.l.b16 %v124
    %v305 = vunpack.c.h.b16 %v124
    %v306 = vunpack.c.l.b16 %v125
    %v307 = vunpack.c.h.b16 %v125
    %v308 = vunpack.c.l.b16 %v126
    %v309 = vunpack.c.h.b16 %v126
    %v310 = vunpack.c.l.b16 %v127
    %v311 = vunpack.c.h.b16 %v127
    %v312 = vunpack.c.l.b16 %v128
    %v313 = vunpack.c.h.b16 %v128
    %v314 = vunpack.c.l.b16 %v129
    %v315 = vunpack.c.h.b16 %v129
    %v316 = vunpack.c.l.b16 %v130
    %v317 = vunpack.c.h.b16 %v130
    %v318 = vunpack.c.l.b16 %v131
    %v319 = vunpack.c.h.b16 %v131
    %v320 = vunpack.c.l.b16 %v132
    %v321 = vunpack.c.h.b16 %v132
    %v322 = vunpack.c.l.b16 %v133
    %v323 = vunpack.c.h.b16 %v133
    %v324 = vunpack.c.l.b16 %v134
    %v325 = vunpack.c.h.b16 %v134
    %v326 = vunpack.c.l.b16 %v135
    %v327 = vunpack.c.h.b16 %v135
    %v328 = vunpack.c.l.b16 %v136
    %v329 = vunpack.c.h.b16 %v136
    %v330 = vunpack.c.l.b16 %v137
    %v331 = vunpack.c.h.b16 %v137
    %v332 = vunpack.c.l.b16 %v138
    %v333 = vunpack.c.h.b16 %v138
    %v334 = vunpack.c.l.b16 %v139
    %v335 = vunpack.c.h.b16 %v139
    %v336 = vunpack.c.l.b16 %v140
    %v337 = vunpack.c.h.b16 %v140
    %v338 = vunpack.c.l.b16 %v141
    %v339 = vunpack.c.h.b16 %v141
    %v340 = vunpack.c.l.b16 %v142
    %v341 = vunpack.c.h.b16 %v142
    %v342 = vpack.c.b16 %v218, %v214
    %v343 = vpack.c.b16 %v219, %v215
    %v344 = vpack.c.b16 %v220, %v216
    %v345 = vpack.c.b16 %v221, %v217
    %v346 = vpack.c.b16 %v226, %v222
    %v347 = vpack.c.b16 %v227, %v223
    %v348 = vpack.c.b16 %v228, %v224
    %v349 = vpack.c.b16 %v229, %v225
    %v350 = vpack.c.b16 %v234, %v230
    %v351 = vpack.c.b16 %v235, %v231
    %v352 = vpack.c.b16 %v236, %v232
    %v353 = vpack.c.b16 %v237, %v233
    %v354 = vpack.c.b16 %v242, %v238
    %v355 = vpack.c.b16 %v243, %v239
    %v356 = vpack.c.b16 %v244, %v240
    %v357 = vpack.c.b16 %v245, %v241
    %v358 = vpack.c.b16 %v250, %v246
    %v359 = vpack.c.b16 %v251, %v247
    %v360 = vpack.c.b16 %v252, %v248
    %v361 = vpack.c.b16 %v253, %v249
    %v362 = vpack.c.b16 %v258, %v254
    %v363 = vpack.c.b16 %v259, %v255
    %v364 = vpack.c.b16 %v260, %v256
    %v365 = vpack.c.b16 %v261, %v257
    %v366 = vpack.c.b16 %v266, %v262
    %v367 = vpack.c.b16 %v267, %v263
    %v368 = vpack.c.b16 %v268, %v264
    %v369 = vpack.c.b16 %v269, %v265
    %v370 = vpack.c.b16 %v274, %v270
    %v371 = vpack.c.b16 %v275, %v271
    %v372 = vpack.c.b16 %v276, %v272
    %v373 = vpack.c.b16 %v277, %v273
    %v374 = vpack.c.b16 %v282, %v278
    %v375 = vpack.c.b16 %v283, %v279
    %v376 = vpack.c.b16 %v284, %v280
    %v377 = vpack.c.b16 %v285, %v281
    %v378 = vpack.c.b16 %v290, %v286
    %v379 = vpack.c.b16 %v291, %v287
    %v380 = vpack.c.b16 %v292, %v288
    %v381 = vpack.c.b16 %v293, %v289
    %v382 = vpack.c.b16 %v298, %v294
    %v383 = vpack.c.b16 %v299, %v295
    %v384 = vpack.c.b16 %v300, %v296
    %v385 = vpack.c.b16 %v301, %v297
    %v386 = vpack.c.b16 %v306, %v302
    %v387 = vpack.c.b16 %v307, %v303
    %v388 = vpack.c.b16 %v308, %v304
    %v389 = vpack.c.b16 %v309, %v305
    %v390 = vpack.c.b16 %v314, %v310
    %v391 = vpack.c.b16 %v315, %v311
    %v392 = vpack.c.b16 %v316, %v312
    %v393 = vpack.c.b16 %v317, %v313
    %v394 = vpack.c.b16 %v322, %v318
    %v395 = vpack.c.b16 %v323, %v319
    %v396 = vpack.c.b16 %v324, %v320
    %v397 = vpack.c.b16 %v325, %v321
    %v398 = vpack.c.b16 %v330, %v326
    %v399 = vpack.c.b16 %v331, %v327
    %v400 = vpack.c.b16 %v332, %v328
    %v401 = vpack.c.b16 %v333, %v329
    %v402 = vpack.c.b16 %v338, %v334
    %v403 = vpack.c.b16 %v339, %v335
    %v404 = vpack.c.b16 %v340, %v336
    %v405 = vpack.c.b16 %v341, %v337
    %470 = vmatprep.subr.bf16.mxu0 %v343
    %471 = vmatpush1.bf16.msra.mxu0 %v342
    %472 = vmatprep.subr.bf16.mxu0 %v347
    %473 = vmatpush1.bf16.msra.mxu0 %v346
    %474 = vmatprep.subr.bf16.mxu0 %v351
    %475 = vmatpush1.bf16.msra.mxu0 %v350
    %476 = vmatprep.subr.bf16.mxu0 %v355
    %477 = vmatpush1.bf16.msra.mxu0 %v354
    %478 = vmatprep.subr.bf16.mxu0 %v359
    %479 = vmatpush1.bf16.msra.mxu0 %v358
    %480 = vmatprep.subr.bf16.mxu0 %v363
    %481 = vmatpush1.bf16.msra.mxu0 %v362
    %482 = vmatprep.subr.bf16.mxu0 %v367
    %483 = vmatpush1.bf16.msra.mxu0 %v366
    %484 = vmatprep.subr.bf16.mxu0 %v371
    %485 = vmatpush1.bf16.msra.mxu0 %v370
    %486 = vmatprep.subr.bf16.mxu0 %v375
    %487 = vmatpush1.bf16.msra.mxu0 %v374
    %488 = vmatprep.subr.bf16.mxu0 %v379
    %489 = vmatpush1.bf16.msra.mxu0 %v378
    %490 = vmatprep.subr.bf16.mxu0 %v383
    %491 = vmatpush1.bf16.msra.mxu0 %v382
    %492 = vmatprep.subr.bf16.mxu0 %v387
    %493 = vmatpush1.bf16.msra.mxu0 %v386
    %494 = vmatprep.subr.bf16.mxu0 %v391
    %495 = vmatpush1.bf16.msra.mxu0 %v390
    %496 = vmatprep.subr.bf16.mxu0 %v395
    %497 = vmatpush1.bf16.msra.mxu0 %v394
    %498 = vmatprep.subr.bf16.mxu0 %v399
    %499 = vmatpush1.bf16.msra.mxu0 %v398
    %500 = vmatprep.subr.bf16.mxu0 %v403
    %501 = vmatpush1.bf16.msra.mxu0 %v402
    %502 = vmatprep.mubr.bf16.mxu0 %v147
    %503 = vmatmul.mubr.bf16.gmra.mrb[0].mxu0 %v146
    %v504 = vpop.f32.mrb[0].mxu0
    %v505 = vadd.f32 0.0, %v504
    %v506 = vpop.f32.mrb[0].mxu0
    %v507 = vadd.f32 0.0, %v506
    %v508 = vpop.f32.mrb[0].mxu0
    %v509 = vpop.f32.mrb[0].mxu0
    %510 = vdwg.mxu0
    %511 = vmatprep.subr.bf16.mxu0 %v345
    %512 = vmatpush1.bf16.msra.mxu0 %v344
    %513 = vmatprep.subr.bf16.mxu0 %v349
    %514 = vmatpush1.bf16.msra.mxu0 %v348
    %515 = vmatprep.subr.bf16.mxu0 %v353
    %516 = vmatpush1.bf16.msra.mxu0 %v352
    %517 = vmatprep.subr.bf16.mxu0 %v357
    %518 = vmatpush1.bf16.msra.mxu0 %v356
    %519 = vmatprep.subr.bf16.mxu0 %v361
    %520 = vmatpush1.bf16.msra.mxu0 %v360
    %521 = vmatprep.subr.bf16.mxu0 %v365
    %522 = vmatpush1.bf16.msra.mxu0 %v364
    %523 = vmatprep.subr.bf16.mxu0 %v369
    %524 = vmatpush1.bf16.msra.mxu0 %v368
    %525 = vmatprep.subr.bf16.mxu0 %v373
    %526 = vmatpush1.bf16.msra.mxu0 %v372
    %527 = vmatprep.subr.bf16.mxu0 %v377
    %528 = vmatpush1.bf16.msra.mxu0 %v376
    %529 = vmatprep.subr.bf16.mxu0 %v381
    %530 = vmatpush1.bf16.msra.mxu0 %v380
    %531 = vmatprep.subr.bf16.mxu0 %v385
    %532 = vmatpush1.bf16.msra.mxu0 %v384
    %533 = vmatprep.subr.bf16.mxu0 %v389
    %534 = vmatpush1.bf16.msra.mxu0 %v388
    %535 = vmatprep.subr.bf16.mxu0 %v393
    %536 = vmatpush1.bf16.msra.mxu0 %v392
    %537 = vmatprep.subr.bf16.mxu0 %v397
    %538 = vmatpush1.bf16.msra.mxu0 %v396
    %539 = vmatprep.subr.bf16.mxu0 %v401
    %540 = vmatpush1.bf16.msra.mxu0 %v400
    %541 = vmatprep.subr.bf16.mxu0 %v405
    %542 = vmatpush1.bf16.msra.mxu0 %v404
    %543 = vmatprep.mubr.bf16.mxu0 %v147
    %544 = vmatmul.mubr.bf16.gmra.mrb[0].mxu0 %v146
    %v545 = vpop.f32.mrb[0].mxu0
    %v546 = vadd.f32 0.0, %v545
    %v547 = vpop.f32.mrb[0].mxu0
    %v548 = vadd.f32 0.0, %v547
    %v549 = vpop.f32.mrb[0].mxu0
    %v550 = vpop.f32.mrb[0].mxu0
    %551 = vdwg.mxu0
    %v552 = vld [vmem:[%s5] sm:$0xf]
    %v553 = vld [vmem:[%s5 + $0x4] sm:$0xf]
    %v554 = vrot.slane %v505, 4
    %v555 = vadd.f32 %v505, %v554
    %v556 = vrot.slane %v555, 2
    %v557 = vadd.f32 %v555, %v556
    %v558 = vrot.slane %v557, 1
    %v559 = vadd.f32 %v557, %v558
    %v560 = vrot.slane %v507, 4
    %v561 = vadd.f32 %v507, %v560
    %v562 = vrot.slane %v561, 2
    %v563 = vadd.f32 %v561, %v562
    %v564 = vrot.slane %v563, 1
    %v565 = vadd.f32 %v563, %v564
    %v566 = vrot.slane %v546, 4
    %v567 = vadd.f32 %v546, %v566
    %v568 = vrot.slane %v567, 2
    %v569 = vadd.f32 %v567, %v568
    %v570 = vrot.slane %v569, 1
    %v571 = vadd.f32 %v569, %v570
    %v572 = vrot.slane %v548, 4
    %v573 = vadd.f32 %v548, %v572
    %v574 = vrot.slane %v573, 2
    %v575 = vadd.f32 %v573, %v574
    %v576 = vrot.slane %v575, 1
    %v577 = vadd.f32 %v575, %v576
    %v578 = vmul.f32 %v505, %v505
    %v579 = vmul.f32 %v507, %v507
    %v580 = vmul.f32 %v546, %v546
    %v581 = vmul.f32 %v548, %v548
    %v582 = vrot.slane %v578, 4
    %v583 = vadd.f32 %v578, %v582
    %v584 = vrot.slane %v583, 2
    %v585 = vadd.f32 %v583, %v584
    %v586 = vrot.slane %v585, 1
    %v587 = vadd.f32 %v585, %v586
    %v588 = vrot.slane %v579, 4
    %v589 = vadd.f32 %v579, %v588
    %v590 = vrot.slane %v589, 2
    %v591 = vadd.f32 %v589, %v590
    %v592 = vrot.slane %v591, 1
    %v593 = vadd.f32 %v591, %v592
    %v594 = vrot.slane %v580, 4
    %v595 = vadd.f32 %v580, %v594
    %v596 = vrot.slane %v595, 2
    %v597 = vadd.f32 %v595, %v596
    %v598 = vrot.slane %v597, 1
    %v599 = vadd.f32 %v597, %v598
    %v600 = vrot.slane %v581, 4
    %v601 = vadd.f32 %v581, %v600
    %v602 = vrot.slane %v601, 2
    %v603 = vadd.f32 %v601, %v602
    %v604 = vrot.slane %v603, 1
    %v605 = vadd.f32 %v603, %v604
    %v606 = vmul.f32 %v559, 0.125
    %v607 = vmul.f32 %v565, 0.125
    %v608 = vmul.f32 %v571, 0.125
    %v609 = vmul.f32 %v577, 0.125
    %v610 = vmul.f32 %v587, 0.125
    %v611 = vmul.f32 %v593, 0.125
    %v612 = vmul.f32 %v599, 0.125
    %v613 = vmul.f32 %v605, 0.125
    %v614 = vmul.f32 %v606, %v606
    %v615 = vmul.f32 %v607, %v607
    %v616 = vmul.f32 %v608, %v608
    %v617 = vmul.f32 %v609, %v609
    %v618 = vsub.f32 %v610, %v614
    %v619 = vsub.f32 %v611, %v615
    %v620 = vsub.f32 %v612, %v616
    %v621 = vsub.f32 %v613, %v617
    %v622 = vadd.f32 %v618, 1e-05
    %v623 = vadd.f32 %v619, 1e-05
    %v624 = vadd.f32 %v620, 1e-05
    %v625 = vadd.f32 %v621, 1e-05
    %v626 = vrsqrt.pop %v622
    %v627 = vrsqrt.pop %v623
    %v628 = vrsqrt.pop %v624
    %v629 = vrsqrt.pop %v625
    %v634 = vcombine.low %v626, %v627
    %v635 = vcombine.low %v628, %v629
    %v637 = vunpack.c.l.s4 1966171168
    %v638 = vunpack.c.0.s8 %v637
    %v639 = vlaneseq
    %v640 = vshrl.u32 %v639, 7
    %v641 = vsub.s32 %v638, %v640
    %v642 = vrot.slane %v634, %v641
    %v644 = vunpack.c.l.s4 1966171168
    %v645 = vunpack.c.0.s8 %v644
    %v646 = vlaneseq
    %v647 = vshrl.u32 %v646, 7
    %v648 = vsub.s32 %v645, %v647
    %v649 = vrot.slane %v635, %v648
    %v650 = vcombine.low %v642, %v649
    %v652 = vunpack.c.l.s4 1966171168
    %v653 = vunpack.c.0.s8 %v652
    %v654 = vlaneseq
    %v655 = vshrl.u32 %v654, 7
    %v656 = vsub.s32 %v653, %v655
    %v657 = vrot.slane %v650, %v656
    %v659 = vmul.f32 %v552, %v657
    %v661 = vlaneseq
    %v662 = vshrl.u32 %v661, 7
    %v663 = vsub.s32 0, %v662
    %v664 = vrot.slane %v659, %v663
    %v665 = vlaneseq
    %v666 = vshrl.u32 %v665, 7
    %v667 = vsub.s32 1, %v666
    %v668 = vrot.slane %v659, %v667
    %v669 = vlaneseq
    %v670 = vshrl.u32 %v669, 7
    %v671 = vsub.s32 2, %v670
    %v672 = vrot.slane %v659, %v671
    %v673 = vlaneseq
    %v674 = vshrl.u32 %v673, 7
    %v675 = vsub.s32 3, %v674
    %v676 = vrot.slane %v659, %v675
    %v681 = vmul.f32 %v606, %v664
    %v682 = vmul.f32 %v607, %v668
    %v683 = vmul.f32 %v608, %v672
    %v684 = vmul.f32 %v609, %v676
    %v689 = vcombine.low %v681, %v682
    %v690 = vcombine.low %v683, %v684
    %v692 = vunpack.c.l.s4 1966171168
    %v693 = vunpack.c.0.s8 %v692
    %v694 = vlaneseq
    %v695 = vshrl.u32 %v694, 7
    %v696 = vsub.s32 %v693, %v695
    %v697 = vrot.slane %v689, %v696
    %v699 = vunpack.c.l.s4 1966171168
    %v700 = vunpack.c.0.s8 %v699
    %v701 = vlaneseq
    %v702 = vshrl.u32 %v701, 7
    %v703 = vsub.s32 %v700, %v702
    %v704 = vrot.slane %v690, %v703
    %v705 = vcombine.low %v697, %v704
    %v707 = vunpack.c.l.s4 1966171168
    %v708 = vunpack.c.0.s8 %v707
    %v709 = vlaneseq
    %v710 = vshrl.u32 %v709, 7
    %v711 = vsub.s32 %v708, %v710
    %v712 = vrot.slane %v705, %v711
    %v714 = vsub.f32 %v553, %v712
    %v715 = vmul.f32 %v505, %v664
    %v716 = vmul.f32 %v507, %v668
    %v717 = vmul.f32 %v546, %v672
    %v718 = vmul.f32 %v548, %v676
    %v720 = vlaneseq
    %v721 = vshrl.u32 %v720, 7
    %v722 = vsub.s32 0, %v721
    %v723 = vrot.slane %v714, %v722
    %v724 = vlaneseq
    %v725 = vshrl.u32 %v724, 7
    %v726 = vsub.s32 1, %v725
    %v727 = vrot.slane %v714, %v726
    %v728 = vlaneseq
    %v729 = vshrl.u32 %v728, 7
    %v730 = vsub.s32 2, %v729
    %v731 = vrot.slane %v714, %v730
    %v732 = vlaneseq
    %v733 = vshrl.u32 %v732, 7
    %v734 = vsub.s32 3, %v733
    %v735 = vrot.slane %v714, %v734
    %v740 = vadd.f32 %v715, %v723
    %v741 = vadd.f32 %v716, %v727
    %v742 = vadd.f32 %v717, %v731
    %v743 = vadd.f32 %v718, %v735
    %v744 = vmax.f32 %v740, 0.0
    %v745 = vmax.f32 %v741, 0.0
    %v746 = vmax.f32 %v742, 0.0
    %v747 = vmax.f32 %v743, 0.0
    %v748 = vpack.c.bf16 %v744, %v744
    %v749 = vpack.c.bf16 %v745, %v745
    %v750 = vpack.c.bf16 %v746, %v746
    %v751 = vpack.c.bf16 %v747, %v747
    %v752 = vld [vmem:[#allocation7] sm:$0xff]
    %v753 = vld [vmem:[#allocation7 + $0x8] sm:$0xff]
    %v754 = vld [vmem:[#allocation7 + $0x10] sm:$0xff]
    %v755 = vld [vmem:[#allocation7 + $0x18] sm:$0xff]
    %v756 = vld [vmem:[#allocation7 + $0x20] sm:$0xff]
    %v757 = vld [vmem:[#allocation7 + $0x28] sm:$0xff]
    %v758 = vld [vmem:[#allocation7 + $0x30] sm:$0xff]
    %v759 = vld [vmem:[#allocation7 + $0x38] sm:$0xff]
    %v760 = vld [vmem:[#allocation7 + $0x40] sm:$0xff]
    %v761 = vld [vmem:[#allocation7 + $0x48] sm:$0xff]
    %v762 = vld [vmem:[#allocation7 + $0x50] sm:$0xff]
    %v763 = vld [vmem:[#allocation7 + $0x58] sm:$0xff]
    %v764 = vld [vmem:[#allocation7 + $0x60] sm:$0xff]
    %v765 = vld [vmem:[#allocation7 + $0x68] sm:$0xff]
    %v766 = vld [vmem:[#allocation7 + $0x70] sm:$0xff]
    %v767 = vld [vmem:[#allocation7 + $0x78] sm:$0xff]
    %v768 = vld [vmem:[#allocation7 + $0x80] sm:$0xff]
    %v769 = vld [vmem:[#allocation7 + $0x88] sm:$0xff]
    %v770 = vld [vmem:[#allocation7 + $0x90] sm:$0xff]
    %v771 = vld [vmem:[#allocation7 + $0x98] sm:$0xff]
    %v772 = vld [vmem:[#allocation7 + $0xa0] sm:$0xff]
    %v773 = vld [vmem:[#allocation7 + $0xa8] sm:$0xff]
    %v774 = vld [vmem:[#allocation7 + $0xb0] sm:$0xff]
    %v775 = vld [vmem:[#allocation7 + $0xb8] sm:$0xff]
    %v776 = vld [vmem:[#allocation7 + $0xc0] sm:$0xff]
    %v777 = vld [vmem:[#allocation7 + $0xc8] sm:$0xff]
    %v778 = vld [vmem:[#allocation7 + $0xd0] sm:$0xff]
    %v779 = vld [vmem:[#allocation7 + $0xd8] sm:$0xff]
    %v780 = vld [vmem:[#allocation7 + $0xe0] sm:$0xff]
    %v781 = vld [vmem:[#allocation7 + $0xe8] sm:$0xff]
    %v782 = vld [vmem:[#allocation7 + $0xf0] sm:$0xff]
    %v783 = vld [vmem:[#allocation7 + $0xf8] sm:$0xff]
    %v784 = vld [vmem:[#allocation7 + $0x100] sm:$0xff]
    %v785 = vld [vmem:[#allocation7 + $0x108] sm:$0xff]
    %v786 = vld [vmem:[#allocation7 + $0x110] sm:$0xff]
    %v787 = vld [vmem:[#allocation7 + $0x118] sm:$0xff]
    %v788 = vld [vmem:[#allocation7 + $0x120] sm:$0xff]
    %v789 = vld [vmem:[#allocation7 + $0x128] sm:$0xff]
    %v790 = vld [vmem:[#allocation7 + $0x130] sm:$0xff]
    %v791 = vld [vmem:[#allocation7 + $0x138] sm:$0xff]
    %v792 = vld [vmem:[#allocation7 + $0x140] sm:$0xff]
    %v793 = vld [vmem:[#allocation7 + $0x148] sm:$0xff]
    %v794 = vld [vmem:[#allocation7 + $0x150] sm:$0xff]
    %v795 = vld [vmem:[#allocation7 + $0x158] sm:$0xff]
    %v796 = vld [vmem:[#allocation7 + $0x160] sm:$0xff]
    %v797 = vld [vmem:[#allocation7 + $0x168] sm:$0xff]
    %v798 = vld [vmem:[#allocation7 + $0x170] sm:$0xff]
    %v799 = vld [vmem:[#allocation7 + $0x178] sm:$0xff]
    %v800 = vld [vmem:[#allocation7 + $0x180] sm:$0xff]
    %v801 = vld [vmem:[#allocation7 + $0x188] sm:$0xff]
    %v802 = vld [vmem:[#allocation7 + $0x190] sm:$0xff]
    %v803 = vld [vmem:[#allocation7 + $0x198] sm:$0xff]
    %v804 = vld [vmem:[#allocation7 + $0x1a0] sm:$0xff]
    %v805 = vld [vmem:[#allocation7 + $0x1a8] sm:$0xff]
    %v806 = vld [vmem:[#allocation7 + $0x1b0] sm:$0xff]
    %v807 = vld [vmem:[#allocation7 + $0x1b8] sm:$0xff]
    %v808 = vld [vmem:[#allocation7 + $0x1c0] sm:$0xff]
    %v809 = vld [vmem:[#allocation7 + $0x1c8] sm:$0xff]
    %v810 = vld [vmem:[#allocation7 + $0x1d0] sm:$0xff]
    %v811 = vld [vmem:[#allocation7 + $0x1d8] sm:$0xff]
    %v812 = vld [vmem:[#allocation7 + $0x1e0] sm:$0xff]
    %v813 = vld [vmem:[#allocation7 + $0x1e8] sm:$0xff]
    %v814 = vld [vmem:[#allocation7 + $0x1f0] sm:$0xff]
    %v815 = vld [vmem:[#allocation7 + $0x1f8] sm:$0xff]
    %v880 = vunpack.c.l.b16 %v752
    %v881 = vunpack.c.h.b16 %v752
    %v882 = vunpack.c.l.b16 %v753
    %v883 = vunpack.c.h.b16 %v753
    %v884 = vunpack.c.l.b16 %v754
    %v885 = vunpack.c.h.b16 %v754
    %v886 = vunpack.c.l.b16 %v755
    %v887 = vunpack.c.h.b16 %v755
    %v888 = vunpack.c.l.b16 %v756
    %v889 = vunpack.c.h.b16 %v756
    %v890 = vunpack.c.l.b16 %v757
    %v891 = vunpack.c.h.b16 %v757
    %v892 = vunpack.c.l.b16 %v758
    %v893 = vunpack.c.h.b16 %v758
    %v894 = vunpack.c.l.b16 %v759
    %v895 = vunpack.c.h.b16 %v759
    %v896 = vunpack.c.l.b16 %v760
    %v897 = vunpack.c.h.b16 %v760
    %v898 = vunpack.c.l.b16 %v761
    %v899 = vunpack.c.h.b16 %v761
    %v900 = vunpack.c.l.b16 %v762
    %v901 = vunpack.c.h.b16 %v762
    %v902 = vunpack.c.l.b16 %v763
    %v903 = vunpack.c.h.b16 %v763
    %v904 = vunpack.c.l.b16 %v764
    %v905 = vunpack.c.h.b16 %v764
    %v906 = vunpack.c.l.b16 %v765
    %v907 = vunpack.c.h.b16 %v765
    %v908 = vunpack.c.l.b16 %v766
    %v909 = vunpack.c.h.b16 %v766
    %v910 = vunpack.c.l.b16 %v767
    %v911 = vunpack.c.h.b16 %v767
    %v912 = vunpack.c.l.b16 %v768
    %v913 = vunpack.c.h.b16 %v768
    %v914 = vunpack.c.l.b16 %v769
    %v915 = vunpack.c.h.b16 %v769
    %v916 = vunpack.c.l.b16 %v770
    %v917 = vunpack.c.h.b16 %v770
    %v918 = vunpack.c.l.b16 %v771
    %v919 = vunpack.c.h.b16 %v771
    %v920 = vunpack.c.l.b16 %v772
    %v921 = vunpack.c.h.b16 %v772
    %v922 = vunpack.c.l.b16 %v773
    %v923 = vunpack.c.h.b16 %v773
    %v924 = vunpack.c.l.b16 %v774
    %v925 = vunpack.c.h.b16 %v774
    %v926 = vunpack.c.l.b16 %v775
    %v927 = vunpack.c.h.b16 %v775
    %v928 = vunpack.c.l.b16 %v776
    %v929 = vunpack.c.h.b16 %v776
    %v930 = vunpack.c.l.b16 %v777
    %v931 = vunpack.c.h.b16 %v777
    %v932 = vunpack.c.l.b16 %v778
    %v933 = vunpack.c.h.b16 %v778
    %v934 = vunpack.c.l.b16 %v779
    %v935 = vunpack.c.h.b16 %v779
    %v936 = vunpack.c.l.b16 %v780
    %v937 = vunpack.c.h.b16 %v780
    %v938 = vunpack.c.l.b16 %v781
    %v939 = vunpack.c.h.b16 %v781
    %v940 = vunpack.c.l.b16 %v782
    %v941 = vunpack.c.h.b16 %v782
    %v942 = vunpack.c.l.b16 %v783
    %v943 = vunpack.c.h.b16 %v783
    %v944 = vunpack.c.l.b16 %v784
    %v945 = vunpack.c.h.b16 %v784
    %v946 = vunpack.c.l.b16 %v785
    %v947 = vunpack.c.h.b16 %v785
    %v948 = vunpack.c.l.b16 %v786
    %v949 = vunpack.c.h.b16 %v786
    %v950 = vunpack.c.l.b16 %v787
    %v951 = vunpack.c.h.b16 %v787
    %v952 = vunpack.c.l.b16 %v788
    %v953 = vunpack.c.h.b16 %v788
    %v954 = vunpack.c.l.b16 %v789
    %v955 = vunpack.c.h.b16 %v789
    %v956 = vunpack.c.l.b16 %v790
    %v957 = vunpack.c.h.b16 %v790
    %v958 = vunpack.c.l.b16 %v791
    %v959 = vunpack.c.h.b16 %v791
    %v960 = vunpack.c.l.b16 %v792
    %v961 = vunpack.c.h.b16 %v792
    %v962 = vunpack.c.l.b16 %v793
    %v963 = vunpack.c.h.b16 %v793
    %v964 = vunpack.c.l.b16 %v794
    %v965 = vunpack.c.h.b16 %v794
    %v966 = vunpack.c.l.b16 %v795
    %v967 = vunpack.c.h.b16 %v795
    %v968 = vunpack.c.l.b16 %v796
    %v969 = vunpack.c.h.b16 %v796
    %v970 = vunpack.c.l.b16 %v797
    %v971 = vunpack.c.h.b16 %v797
    %v972 = vunpack.c.l.b16 %v798
    %v973 = vunpack.c.h.b16 %v798
    %v974 = vunpack.c.l.b16 %v799
    %v975 = vunpack.c.h.b16 %v799
    %v976 = vunpack.c.l.b16 %v800
    %v977 = vunpack.c.h.b16 %v800
    %v978 = vunpack.c.l.b16 %v801
    %v979 = vunpack.c.h.b16 %v801
    %v980 = vunpack.c.l.b16 %v802
    %v981 = vunpack.c.h.b16 %v802
    %v982 = vunpack.c.l.b16 %v803
    %v983 = vunpack.c.h.b16 %v803
    %v984 = vunpack.c.l.b16 %v804
    %v985 = vunpack.c.h.b16 %v804
    %v986 = vunpack.c.l.b16 %v805
    %v987 = vunpack.c.h.b16 %v805
    %v988 = vunpack.c.l.b16 %v806
    %v989 = vunpack.c.h.b16 %v806
    %v990 = vunpack.c.l.b16 %v807
    %v991 = vunpack.c.h.b16 %v807
    %v992 = vunpack.c.l.b16 %v808
    %v993 = vunpack.c.h.b16 %v808
    %v994 = vunpack.c.l.b16 %v809
    %v995 = vunpack.c.h.b16 %v809
    %v996 = vunpack.c.l.b16 %v810
    %v997 = vunpack.c.h.b16 %v810
    %v998 = vunpack.c.l.b16 %v811
    %v999 = vunpack.c.h.b16 %v811
    %v1000 = vunpack.c.l.b16 %v812
    %v1001 = vunpack.c.h.b16 %v812
    %v1002 = vunpack.c.l.b16 %v813
    %v1003 = vunpack.c.h.b16 %v813
    %v1004 = vunpack.c.l.b16 %v814
    %v1005 = vunpack.c.h.b16 %v814
    %v1006 = vunpack.c.l.b16 %v815
    %v1007 = vunpack.c.h.b16 %v815
    %v1008 = vpack.c.b16 %v882, %v880
    %v1009 = vpack.c.b16 %v883, %v881
    %v1010 = vpack.c.b16 %v886, %v884
    %v1011 = vpack.c.b16 %v887, %v885
    %v1012 = vpack.c.b16 %v890, %v888
    %v1013 = vpack.c.b16 %v891, %v889
    %v1014 = vpack.c.b16 %v894, %v892
    %v1015 = vpack.c.b16 %v895, %v893
    %v1016 = vpack.c.b16 %v898, %v896
    %v1017 = vpack.c.b16 %v899, %v897
    %v1018 = vpack.c.b16 %v902, %v900
    %v1019 = vpack.c.b16 %v903, %v901
    %v1020 = vpack.c.b16 %v906, %v904
    %v1021 = vpack.c.b16 %v907, %v905
    %v1022 = vpack.c.b16 %v910, %v908
    %v1023 = vpack.c.b16 %v911, %v909
    %v1024 = vpack.c.b16 %v914, %v912
    %v1025 = vpack.c.b16 %v915, %v913
    %v1026 = vpack.c.b16 %v918, %v916
    %v1027 = vpack.c.b16 %v919, %v917
    %v1028 = vpack.c.b16 %v922, %v920
    %v1029 = vpack.c.b16 %v923, %v921
    %v1030 = vpack.c.b16 %v926, %v924
    %v1031 = vpack.c.b16 %v927, %v925
    %v1032 = vpack.c.b16 %v930, %v928
    %v1033 = vpack.c.b16 %v931, %v929
    %v1034 = vpack.c.b16 %v934, %v932
    %v1035 = vpack.c.b16 %v935, %v933
    %v1036 = vpack.c.b16 %v938, %v936
    %v1037 = vpack.c.b16 %v939, %v937
    %v1038 = vpack.c.b16 %v942, %v940
    %v1039 = vpack.c.b16 %v943, %v941
    %v1040 = vpack.c.b16 %v946, %v944
    %v1041 = vpack.c.b16 %v947, %v945
    %v1042 = vpack.c.b16 %v950, %v948
    %v1043 = vpack.c.b16 %v951, %v949
    %v1044 = vpack.c.b16 %v954, %v952
    %v1045 = vpack.c.b16 %v955, %v953
    %v1046 = vpack.c.b16 %v958, %v956
    %v1047 = vpack.c.b16 %v959, %v957
    %v1048 = vpack.c.b16 %v962, %v960
    %v1049 = vpack.c.b16 %v963, %v961
    %v1050 = vpack.c.b16 %v966, %v964
    %v1051 = vpack.c.b16 %v967, %v965
    %v1052 = vpack.c.b16 %v970, %v968
    %v1053 = vpack.c.b16 %v971, %v969
    %v1054 = vpack.c.b16 %v974, %v972
    %v1055 = vpack.c.b16 %v975, %v973
    %v1056 = vpack.c.b16 %v978, %v976
    %v1057 = vpack.c.b16 %v979, %v977
    %v1058 = vpack.c.b16 %v982, %v980
    %v1059 = vpack.c.b16 %v983, %v981
    %v1060 = vpack.c.b16 %v986, %v984
    %v1061 = vpack.c.b16 %v987, %v985
    %v1062 = vpack.c.b16 %v990, %v988
    %v1063 = vpack.c.b16 %v991, %v989
    %v1064 = vpack.c.b16 %v994, %v992
    %v1065 = vpack.c.b16 %v995, %v993
    %v1066 = vpack.c.b16 %v998, %v996
    %v1067 = vpack.c.b16 %v999, %v997
    %v1068 = vpack.c.b16 %v1002, %v1000
    %v1069 = vpack.c.b16 %v1003, %v1001
    %v1070 = vpack.c.b16 %v1006, %v1004
    %v1071 = vpack.c.b16 %v1007, %v1005
    %1136 = vmatprep.subr.bf16.mxu0 %v1009
    %1137 = vmatpush1.bf16.msra.mxu0 %v1008
    %1138 = vmatprep.subr.bf16.mxu0 %v1011
    %1139 = vmatpush1.bf16.msra.mxu0 %v1010
    %1140 = vmatprep.subr.bf16.mxu0 %v1013
    %1141 = vmatpush1.bf16.msra.mxu0 %v1012
    %1142 = vmatprep.subr.bf16.mxu0 %v1015
    %1143 = vmatpush1.bf16.msra.mxu0 %v1014
    %1144 = vmatprep.subr.bf16.mxu0 %v1017
    %1145 = vmatpush1.bf16.msra.mxu0 %v1016
    %1146 = vmatprep.subr.bf16.mxu0 %v1019
    %1147 = vmatpush1.bf16.msra.mxu0 %v1018
    %1148 = vmatprep.subr.bf16.mxu0 %v1021
    %1149 = vmatpush1.bf16.msra.mxu0 %v1020
    %1150 = vmatprep.subr.bf16.mxu0 %v1023
    %1151 = vmatpush1.bf16.msra.mxu0 %v1022
    %1152 = vmatprep.subr.bf16.mxu0 %v1025
    %1153 = vmatpush1.bf16.msra.mxu0 %v1024
    %1154 = vmatprep.subr.bf16.mxu0 %v1027
    %1155 = vmatpush1.bf16.msra.mxu0 %v1026
    %1156 = vmatprep.subr.bf16.mxu0 %v1029
    %1157 = vmatpush1.bf16.msra.mxu0 %v1028
    %1158 = vmatprep.subr.bf16.mxu0 %v1031
    %1159 = vmatpush1.bf16.msra.mxu0 %v1030
    %1160 = vmatprep.subr.bf16.mxu0 %v1033
    %1161 = vmatpush1.bf16.msra.mxu0 %v1032
    %1162 = vmatprep.subr.bf16.mxu0 %v1035
    %1163 = vmatpush1.bf16.msra.mxu0 %v1034
    %1164 = vmatprep.subr.bf16.mxu0 %v1037
    %1165 = vmatpush1.bf16.msra.mxu0 %v1036
    %1166 = vmatprep.subr.bf16.mxu0 %v1039
    %1167 = vmatpush1.bf16.msra.mxu0 %v1038
    %1168 = vmatprep.mubr.bf16.mxu0 %v749
    %1169 = vmatmul.mubr.bf16.gmra.mrb[0].mxu0 %v748
    %v1170 = vpop.f32.mrb[0].mxu0
    %v1171 = vadd.f32 0.0, %v1170
    %v1172 = vpop.f32.mrb[0].mxu0
    %v1173 = vadd.f32 0.0, %v1172
    %v1174 = vpop.f32.mrb[0].mxu0
    %v1175 = vpop.f32.mrb[0].mxu0
    %1176 = vdwg.mxu0
    %1177 = vmatprep.subr.bf16.mxu0 %v1041
    %1178 = vmatpush1.bf16.msra.mxu0 %v1040
    %1179 = vmatprep.subr.bf16.mxu0 %v1043
    %1180 = vmatpush1.bf16.msra.mxu0 %v1042
    %1181 = vmatprep.subr.bf16.mxu0 %v1045
    %1182 = vmatpush1.bf16.msra.mxu0 %v1044
    %1183 = vmatprep.subr.bf16.mxu0 %v1047
    %1184 = vmatpush1.bf16.msra.mxu0 %v1046
    %1185 = vmatprep.subr.bf16.mxu0 %v1049
    %1186 = vmatpush1.bf16.msra.mxu0 %v1048
    %1187 = vmatprep.subr.bf16.mxu0 %v1051
    %1188 = vmatpush1.bf16.msra.mxu0 %v1050
    %1189 = vmatprep.subr.bf16.mxu0 %v1053
    %1190 = vmatpush1.bf16.msra.mxu0 %v1052
    %1191 = vmatprep.subr.bf16.mxu0 %v1055
    %1192 = vmatpush1.bf16.msra.mxu0 %v1054
    %1193 = vmatprep.subr.bf16.mxu0 %v1057
    %1194 = vmatpush1.bf16.msra.mxu0 %v1056
    %1195 = vmatprep.subr.bf16.mxu0 %v1059
    %1196 = vmatpush1.bf16.msra.mxu0 %v1058
    %1197 = vmatprep.subr.bf16.mxu0 %v1061
    %1198 = vmatpush1.bf16.msra.mxu0 %v1060
    %1199 = vmatprep.subr.bf16.mxu0 %v1063
    %1200 = vmatpush1.bf16.msra.mxu0 %v1062
    %1201 = vmatprep.subr.bf16.mxu0 %v1065
    %1202 = vmatpush1.bf16.msra.mxu0 %v1064
    %1203 = vmatprep.subr.bf16.mxu0 %v1067
    %1204 = vmatpush1.bf16.msra.mxu0 %v1066
    %1205 = vmatprep.subr.bf16.mxu0 %v1069
    %1206 = vmatpush1.bf16.msra.mxu0 %v1068
    %1207 = vmatprep.subr.bf16.mxu0 %v1071
    %1208 = vmatpush1.bf16.msra.mxu0 %v1070
    %1209 = vmatprep.mubr.bf16.mxu0 %v751
    %1210 = vmatmul.mubr.bf16.gmra.mrb[0].mxu0 %v750
    %v1211 = vpop.f32.mrb[0].mxu0
    %v1212 = vadd.f32 %v1171, %v1211
    %v1213 = vpop.f32.mrb[0].mxu0
    %v1214 = vadd.f32 %v1173, %v1213
    %v1215 = vpop.f32.mrb[0].mxu0
    %v1216 = vpop.f32.mrb[0].mxu0
    %1217 = vdwg.mxu0
    %v1218 = vld [vmem:[%s5 + $0x8] sm:$0x3]
    %v1219 = vld [vmem:[%s5 + $0xa] sm:$0x3]
    %v1220 = vrot.slane %v1212, 4
    %v1221 = vadd.f32 %v1212, %v1220
    %v1222 = vrot.slane %v1221, 2
    %v1223 = vadd.f32 %v1221, %v1222
    %v1224 = vrot.slane %v1223, 1
    %v1225 = vadd.f32 %v1223, %v1224
    %v1226 = vrot.slane %v1214, 4
    %v1227 = vadd.f32 %v1214, %v1226
    %v1228 = vrot.slane %v1227, 2
    %v1229 = vadd.f32 %v1227, %v1228
    %v1230 = vrot.slane %v1229, 1
    %v1231 = vadd.f32 %v1229, %v1230
    %v1232 = vmul.f32 %v1212, %v1212
    %v1233 = vmul.f32 %v1214, %v1214
    %v1234 = vrot.slane %v1232, 4
    %v1235 = vadd.f32 %v1232, %v1234
    %v1236 = vrot.slane %v1235, 2
    %v1237 = vadd.f32 %v1235, %v1236
    %v1238 = vrot.slane %v1237, 1
    %v1239 = vadd.f32 %v1237, %v1238
    %v1240 = vrot.slane %v1233, 4
    %v1241 = vadd.f32 %v1233, %v1240
    %v1242 = vrot.slane %v1241, 2
    %v1243 = vadd.f32 %v1241, %v1242
    %v1244 = vrot.slane %v1243, 1
    %v1245 = vadd.f32 %v1243, %v1244
    %v1246 = vmul.f32 %v1225, 0.125
    %v1247 = vmul.f32 %v1231, 0.125
    %v1248 = vmul.f32 %v1239, 0.125
    %v1249 = vmul.f32 %v1245, 0.125
    %v1250 = vmul.f32 %v1246, %v1246
    %v1251 = vmul.f32 %v1247, %v1247
    %v1252 = vsub.f32 %v1248, %v1250
    %v1253 = vsub.f32 %v1249, %v1251
    %v1254 = vadd.f32 %v1252, 1e-05
    %v1255 = vadd.f32 %v1253, 1e-05
    %v1256 = vrsqrt.pop %v1254
    %v1257 = vrsqrt.pop %v1255
    %v1260 = vcombine.low %v1256, %v1257
    %v1262 = vunpack.c.l.s4 1966171168
    %v1263 = vunpack.c.0.s8 %v1262
    %v1264 = vlaneseq
    %v1265 = vshrl.u32 %v1264, 7
    %v1266 = vsub.s32 %v1263, %v1265
    %v1267 = vrot.slane %v1260, %v1266
    %v1269 = vunpack.c.l.s4 1966171168
    %v1270 = vunpack.c.0.s8 %v1269
    %v1271 = vlaneseq
    %v1272 = vshrl.u32 %v1271, 7
    %v1273 = vsub.s32 %v1270, %v1272
    %v1274 = vrot.slane %v1267, %v1273
    %v1276 = vmul.f32 %v1218, %v1274
    %v1278 = vlaneseq
    %v1279 = vshrl.u32 %v1278, 7
    %v1280 = vsub.s32 0, %v1279
    %v1281 = vrot.slane %v1276, %v1280
    %v1282 = vlaneseq
    %v1283 = vshrl.u32 %v1282, 7
    %v1284 = vsub.s32 1, %v1283
    %v1285 = vrot.slane %v1276, %v1284
    %v1288 = vmul.f32 %v1246, %v1281
    %v1289 = vmul.f32 %v1247, %v1285
    %v1292 = vcombine.low %v1288, %v1289
    %v1294 = vunpack.c.l.s4 1966171168
    %v1295 = vunpack.c.0.s8 %v1294
    %v1296 = vlaneseq
    %v1297 = vshrl.u32 %v1296, 7
    %v1298 = vsub.s32 %v1295, %v1297
    %v1299 = vrot.slane %v1292, %v1298
    %v1301 = vunpack.c.l.s4 1966171168
    %v1302 = vunpack.c.0.s8 %v1301
    %v1303 = vlaneseq
    %v1304 = vshrl.u32 %v1303, 7
    %v1305 = vsub.s32 %v1302, %v1304
    %v1306 = vrot.slane %v1299, %v1305
    %v1308 = vsub.f32 %v1219, %v1306
    %v1309 = vmul.f32 %v1212, %v1281
    %v1310 = vmul.f32 %v1214, %v1285
    %v1312 = vlaneseq
    %v1313 = vshrl.u32 %v1312, 7
    %v1314 = vsub.s32 0, %v1313
    %v1315 = vrot.slane %v1308, %v1314
    %v1316 = vlaneseq
    %v1317 = vshrl.u32 %v1316, 7
    %v1318 = vsub.s32 1, %v1317
    %v1319 = vrot.slane %v1308, %v1318
    %v1322 = vadd.f32 %v1309, %v1315
    %v1323 = vadd.f32 %v1310, %v1319
    %v1324 = vmax.f32 %v1322, 0.0
    %v1325 = vmax.f32 %v1323, 0.0
    %v1326 = vpack.c.bf16 %v1324, %v1324
    %v1327 = vpack.c.bf16 %v1325, %v1325
    %v1328 = vld [vmem:[#allocation8] sm:$0xf]
    %v1329 = vld [vmem:[#allocation8 + $0x4] sm:$0xf]
    %v1330 = vld [vmem:[#allocation8 + $0x8] sm:$0xf]
    %v1331 = vld [vmem:[#allocation8 + $0xc] sm:$0xf]
    %v1332 = vld [vmem:[#allocation8 + $0x10] sm:$0xf]
    %v1333 = vld [vmem:[#allocation8 + $0x14] sm:$0xf]
    %v1334 = vld [vmem:[#allocation8 + $0x18] sm:$0xf]
    %v1335 = vld [vmem:[#allocation8 + $0x1c] sm:$0xf]
    %v1336 = vld [vmem:[#allocation8 + $0x20] sm:$0xf]
    %v1337 = vld [vmem:[#allocation8 + $0x24] sm:$0xf]
    %v1338 = vld [vmem:[#allocation8 + $0x28] sm:$0xf]
    %v1339 = vld [vmem:[#allocation8 + $0x2c] sm:$0xf]
    %v1340 = vld [vmem:[#allocation8 + $0x30] sm:$0xf]
    %v1341 = vld [vmem:[#allocation8 + $0x34] sm:$0xf]
    %v1342 = vld [vmem:[#allocation8 + $0x38] sm:$0xf]
    %v1343 = vld [vmem:[#allocation8 + $0x3c] sm:$0xf]
    %v1344 = vld [vmem:[#allocation8 + $0x40] sm:$0xf]
    %v1345 = vld [vmem:[#allocation8 + $0x44] sm:$0xf]
    %v1346 = vld [vmem:[#allocation8 + $0x48] sm:$0xf]
    %v1347 = vld [vmem:[#allocation8 + $0x4c] sm:$0xf]
    %v1348 = vld [vmem:[#allocation8 + $0x50] sm:$0xf]
    %v1349 = vld [vmem:[#allocation8 + $0x54] sm:$0xf]
    %v1350 = vld [vmem:[#allocation8 + $0x58] sm:$0xf]
    %v1351 = vld [vmem:[#allocation8 + $0x5c] sm:$0xf]
    %v1352 = vld [vmem:[#allocation8 + $0x60] sm:$0xf]
    %v1353 = vld [vmem:[#allocation8 + $0x64] sm:$0xf]
    %v1354 = vld [vmem:[#allocation8 + $0x68] sm:$0xf]
    %v1355 = vld [vmem:[#allocation8 + $0x6c] sm:$0xf]
    %v1356 = vld [vmem:[#allocation8 + $0x70] sm:$0xf]
    %v1357 = vld [vmem:[#allocation8 + $0x74] sm:$0xf]
    %v1358 = vld [vmem:[#allocation8 + $0x78] sm:$0xf]
    %v1359 = vld [vmem:[#allocation8 + $0x7c] sm:$0xf]
    %v1360 = vld [vmem:[%s4] sm:$0x1]
    %v1362 = vlaneseq
    %v1363 = vshrl.u32 %v1362, 7
    %v1364 = vsub.s32 0, %v1363
    %v1365 = vrot.slane %v1360, %v1364
    %v1399 = vunpack.c.l.b16 %v1328
    %v1400 = vunpack.c.l.b16 %v1329
    %v1401 = vunpack.c.l.b16 %v1330
    %v1402 = vunpack.c.l.b16 %v1331
    %v1403 = vunpack.c.l.b16 %v1332
    %v1404 = vunpack.c.l.b16 %v1333
    %v1405 = vunpack.c.l.b16 %v1334
    %v1406 = vunpack.c.l.b16 %v1335
    %v1407 = vunpack.c.l.b16 %v1336
    %v1408 = vunpack.c.l.b16 %v1337
    %v1409 = vunpack.c.l.b16 %v1338
    %v1410 = vunpack.c.l.b16 %v1339
    %v1411 = vunpack.c.l.b16 %v1340
    %v1412 = vunpack.c.l.b16 %v1341
    %v1413 = vunpack.c.l.b16 %v1342
    %v1414 = vunpack.c.l.b16 %v1343
    %v1415 = vunpack.c.l.b16 %v1344
    %v1416 = vunpack.c.l.b16 %v1345
    %v1417 = vunpack.c.l.b16 %v1346
    %v1418 = vunpack.c.l.b16 %v1347
    %v1419 = vunpack.c.l.b16 %v1348
    %v1420 = vunpack.c.l.b16 %v1349
    %v1421 = vunpack.c.l.b16 %v1350
    %v1422 = vunpack.c.l.b16 %v1351
    %v1423 = vunpack.c.l.b16 %v1352
    %v1424 = vunpack.c.l.b16 %v1353
    %v1425 = vunpack.c.l.b16 %v1354
    %v1426 = vunpack.c.l.b16 %v1355
    %v1427 = vunpack.c.l.b16 %v1356
    %v1428 = vunpack.c.l.b16 %v1357
    %v1429 = vunpack.c.l.b16 %v1358
    %v1430 = vunpack.c.l.b16 %v1359
    %v1431 = vpack.c.b16 %v1400, %v1399
    %v1432 = vpack.c.b16 %v1402, %v1401
    %v1433 = vpack.c.b16 %v1404, %v1403
    %v1434 = vpack.c.b16 %v1406, %v1405
    %v1435 = vpack.c.b16 %v1408, %v1407
    %v1436 = vpack.c.b16 %v1410, %v1409
    %v1437 = vpack.c.b16 %v1412, %v1411
    %v1438 = vpack.c.b16 %v1414, %v1413
    %v1439 = vpack.c.b16 %v1416, %v1415
    %v1440 = vpack.c.b16 %v1418, %v1417
    %v1441 = vpack.c.b16 %v1420, %v1419
    %v1442 = vpack.c.b16 %v1422, %v1421
    %v1443 = vpack.c.b16 %v1424, %v1423
    %v1444 = vpack.c.b16 %v1426, %v1425
    %v1445 = vpack.c.b16 %v1428, %v1427
    %v1446 = vpack.c.b16 %v1430, %v1429
    %1463 = vmatprep.subr.bf16.mxu0 0
    %1464 = vmatpush1.bf16.msra.mxu0 %v1431
    %1465 = vmatprep.subr.bf16.mxu0 0
    %1466 = vmatpush1.bf16.msra.mxu0 %v1432
    %1467 = vmatprep.subr.bf16.mxu0 0
    %1468 = vmatpush1.bf16.msra.mxu0 %v1433
    %1469 = vmatprep.subr.bf16.mxu0 0
    %1470 = vmatpush1.bf16.msra.mxu0 %v1434
    %1471 = vmatprep.subr.bf16.mxu0 0
    %1472 = vmatpush1.bf16.msra.mxu0 %v1435
    %1473 = vmatprep.subr.bf16.mxu0 0
    %1474 = vmatpush1.bf16.msra.mxu0 %v1436
    %1475 = vmatprep.subr.bf16.mxu0 0
    %1476 = vmatpush1.bf16.msra.mxu0 %v1437
    %1477 = vmatprep.subr.bf16.mxu0 0
    %1478 = vmatpush1.bf16.msra.mxu0 %v1438
    %1479 = vmatprep.subr.bf16.mxu0 0
    %1480 = vmatpush1.bf16.msra.mxu0 %v1439
    %1481 = vmatprep.subr.bf16.mxu0 0
    %1482 = vmatpush1.bf16.msra.mxu0 %v1440
    %1483 = vmatprep.subr.bf16.mxu0 0
    %1484 = vmatpush1.bf16.msra.mxu0 %v1441
    %1485 = vmatprep.subr.bf16.mxu0 0
    %1486 = vmatpush1.bf16.msra.mxu0 %v1442
    %1487 = vmatprep.subr.bf16.mxu0 0
    %1488 = vmatpush1.bf16.msra.mxu0 %v1443
    %1489 = vmatprep.subr.bf16.mxu0 0
    %1490 = vmatpush1.bf16.msra.mxu0 %v1444
    %1491 = vmatprep.subr.bf16.mxu0 0
    %1492 = vmatpush1.bf16.msra.mxu0 %v1445
    %1493 = vmatprep.subr.bf16.mxu0 0
    %1494 = vmatpush1.bf16.msra.mxu0 %v1446
    %1495 = vmatprep.mubr.bf16.mxu0 %v1327
    %1496 = vmatmul.mubr.bf16.gmra.mrb[0].mxu0 %v1326
    %v1497 = vpop.f32.mrb[0].mxu0
    %v1498 = vadd.f32 %v1365, %v1497
    %v1499 = vpop.f32.mrb[0].mxu0
    %v1500 = vpop.f32.mrb[0].mxu0
    %v1501 = vpop.f32.mrb[0].mxu0
    %1502 = vdwg.mxu0
    %1503 = vmax.xlane.f32.xlu0 %v1498
    %v1504 = vpop.xlane.xlu0 %1503
    %v1505 = vsub.f32 %v1498, %v1504
    %v1506 = vmul.f32 %v1505, 1.442695
    %v1507 = vpow.pop %v1506
    %1508 = vadd.xlane.f32.xlu0 %v1507
    %v1509 = vpop.xlane.xlu0 %1508
    %v1510 = vrcp.pop %v1509
    %v1511 = vmul.f32 %v1507, %v1510
    %1512 = vst [vmem:[#allocation10] sm:$0xff] %v1511
    // Predicated region
    $region42: #{tpu_custom_call.1} parent=1 // pred_check
      _
    $region43: #{tpu_custom_call.1} parent=1 // pred_check_branch
      %1514 = sbr.rel (0) target = $region45
    $region44: #{tpu_custom_call.1} parent=1 // pred_region
      %s1516 = ssub.s32 128, 128
      %1517 = vsyncadd [#allocation4], %s1516
      %s1519 = sshll.u32 [#allocation10], 4
      %s1520 = int_to_ptr.vmem [resolvable:$true] %s1519
      %1522 = dma.vmem_to_hbm [thread:$0]  %s1520, 128, %s6, [#allocation4]
    $region45: #{tpu_custom_call.1} parent=1 // pred_fallthru
      _
    // Predicated region
    $region46: #{tpu_custom_call.1} parent=1 // pred_check
      _
    $region47: #{tpu_custom_call.1} parent=1 // pred_check_branch
      %1524 = sbr.rel (0) target = $region49
    $region48: #{tpu_custom_call.1} parent=1 // pred_region
      %1525 = dma.done [#allocation4], 128
    $region49: #{tpu_custom_call.1} parent=1 // pred_fallthru
      _
    %1526 = vsyncpa [#allocation3], 1
    %1527 = vsyncpa [#allocation6], 1
    %1528 = vsyncpa [#allocation9], 1
    %1529 = vsyncpa [#allocation4], 1

</llo_original>
